<compile_context>
chip_gen: v5e
topology: v5e:2x2
jax: 0.10.0
libtpu: 0.0.40
codegen_flags: <defaults>
</compile_context>

<pallas_src>
import math

import jax
import jax.numpy as jnp
from jax.experimental import pallas as pl
from jax.experimental.pallas import tpu as pltpu


def _make_acl_kernel(weight, epsilon, B, H, W):
    """Builds the per-(batch-row, class) partial-loss kernel.

    All normalizers (1/(B*H*W), 1/(B*(H-2)*(W-2))), the `weight`, and the three
    sqrt constants of the {0,1,2} counting identity are folded at trace time,
    so the kernel body is pure VPU adds/muls plus three full reductions.
    """
    weight = float(weight)
    epsilon = float(epsilon)

    # sqrt elimination:  dr, dc in {0,1}  =>  dr + dc in {0,1,2}, hence
    #   sum(sqrt(dr+dc+eps)) = sqrt(eps)*N
    #                        + (sqrt(1+eps) - sqrt(eps))                 * sum(dr+dc)
    #                        + (sqrt(2+eps) - 2*sqrt(1+eps) + sqrt(eps)) * sum(dr*dc)
    s0 = math.sqrt(epsilon)
    s1 = math.sqrt(1.0 + epsilon)
    s2 = math.sqrt(2.0 + epsilon)
    coef_s = s1 - s0
    coef_p = s2 - 2.0 * s1 + s0

    # Each grid cell contributes
    #   weight * length_sum_tile / (B*(H-2)*(W-2)) + region_sum_tile / (B*H*W)
    # so summing the (B, C) partials reproduces sum_c(weight*length_c + region_c).
    len_scale = weight / (B * (H - 2) * (W - 2))
    reg_scale = 1.0 / (B * H * W)
    len_base = weight * s0 / B  # == len_scale * s0 * (H-2) * (W-2)

    def kernel(pred_ref, tgt_ref, out_ref):
        # pred_ref: (H, W) f32 scores of class `c` for batch row `b`
        # tgt_ref : (H, W) int8 labels for batch row `b` (reused across classes)
        # out_ref : (1, 1) f32 partial loss for this (b, c) grid cell
        c = pl.program_id(1)

        os_ = (pred_ref[...] >= 0.5).astype(jnp.float32)                  # binarized pred
        ts = (tgt_ref[...].astype(jnp.int32) == c).astype(jnp.float32)    # one-hot target

        # region_in + region_out, simplified for binary os/ts:
        #   os*(ts-1)^2 + (1-os)*ts^2 = os + ts - 2*os*ts
        reg_sum = jnp.sum(os_ + ts - 2.0 * (os_ * ts), keepdims=True)     # (1, 1)

        # Squared forward differences (values in {0, 1}).
        d_h = (os_[1:, :] - os_[:-1, :]) ** 2                             # (H-1, W)
        d_w = (os_[:, 1:] - os_[:, :-1]) ** 2                             # (H, W-1)
        dr = d_h[1:, :-2]   # (H-2, W-2): (os[r+2, c] - os[r+1, c])^2
        dc = d_w[:-2, 1:]   # (H-2, W-2): (os[r, c+2] - os[r, c+1])^2

        s_sum = jnp.sum(dr + dc, keepdims=True)                           # (1, 1)
        p_sum = jnp.sum(dr * dc, keepdims=True)                           # (1, 1)

        out_ref[...] = (len_base
                        + len_scale * (coef_s * s_sum + coef_p * p_sum)
                        + reg_scale * reg_sum)

    return kernel


def active_contour_loss(output, target, weight=1.0, epsilon=1e-8,
                        ignore_index=None, reduction="mean"):
    """Pallas implementation of ActiveContourLoss.forward."""
    B, C, H, W = output.shape
    assert C <= 127, "int8 label packing assumes fewer than 128 classes"
    output = output.astype(jnp.float32)
    target = target.astype(jnp.int8)  # 4x smaller label stream in HBM

    kernel = _make_acl_kernel(weight, epsilon, B, H, W)

    partials = pl.pallas_call(
        kernel,
        out_shape=jax.ShapeDtypeStruct((B, C, 1, 1), jnp.float32),
        grid=(B, C),  # C innermost: label tile is DMA'd once per batch row
        in_specs=[
            # one (H, W) class slice per grid cell; leading dims squeezed away
            pl.BlockSpec((pl.Squeezed(), pl.Squeezed(), H, W),
                         lambda b, c: (b, c, 0, 0)),
            # full-resolution label map for batch row b (revisited across classes)
            pl.BlockSpec((pl.Squeezed(), H, W),
                         lambda b, c: (b, 0, 0)),
        ],
        out_specs=pl.BlockSpec((pl.Squeezed(), pl.Squeezed(), 1, 1),
                               lambda b, c: (b, c, 0, 0)),
        compiler_params=pltpu.CompilerParams(
            # Every (b, c) cell is independent and owns its own output block,
            # so both axes can be sharded across TensorCores (v7x megacore).
            dimension_semantics=("parallel", "parallel"),
            # Explicit scoped-VMEM budget with headroom on every generation
            # (defaults: 16 MiB on v5e, 32 MiB on v6e/v7x; v7x physical = 64 MiB).
            vmem_limit_bytes=48 * 1024 * 1024,
        ),
    )(output, target)

    per_class = jnp.sum(partials[:, :, 0, 0], axis=0)  # (C,) per-class losses
    if ignore_index is not None and 0 <= ignore_index < C:
        per_class = jnp.where(jnp.arange(C) == ignore_index, 0.0, per_class)
        n_count = C - 1
    else:
        n_count = C
    loss = jnp.sum(per_class)
    if reduction == "mean":
        loss = loss / n_count
    return loss


def _reference_loss(output, target, weight=1.0, epsilon=1e-8,
                    ignore_index=None, reduction="mean"):
    """Pure-JAX mirror of the PyTorch forward."""
    B, C, H, W = output.shape
    total = jnp.float32(0.0)
    n_count = 0
    for i in range(C):
        if ignore_index is not None and i == ignore_index:
            continue
        os_ = (output[:, i] >= 0.5).astype(jnp.float32)
        ts = (target == i).astype(jnp.float32)
        dr = (os_[:, 2:, :-2] - os_[:, 1:-1, :-2]) ** 2
        dc = (os_[:, :-2, 2:] - os_[:, :-2, 1:-1]) ** 2
        length = jnp.mean(jnp.sqrt(jnp.abs(dr + dc) + epsilon))
        region_in = jnp.mean(os_ * (ts - 1.0) ** 2)
        region_out = jnp.mean((1.0 - os_) * ts ** 2)
        total = total + weight * length + region_in + region_out
        n_count += 1
    if reduction == "mean":
        total = total / n_count
    return total


if __name__ == "__main__":
    B, C, H, W = 2, 4, 16, 16
    key = jax.random.PRNGKey(0)
    k1, k2 = jax.random.split(key)
    output = jax.random.uniform(k1, (B, C, H, W), dtype=jnp.float32)
    target = jax.random.randint(k2, (B, H, W), 0, C, dtype=jnp.int32)

    loss = jax.block_until_ready(active_contour_loss(output, target))
    ref = _reference_loss(output, target)
    assert jnp.allclose(loss, ref, atol=1e-5, rtol=1e-5), (loss, ref)

    # ignore_index path (handled in the wrapper on the (B, C) partials).
    loss_ig = jax.block_until_ready(
        active_contour_loss(output, target, ignore_index=1))
    ref_ig = _reference_loss(output, target, ignore_index=1)
    assert jnp.allclose(loss_ig, ref_ig, atol=1e-5, rtol=1e-5), (loss_ig, ref_ig)

    print("KERNEL_OK")
</pallas_src>

<mosaic_0001>
module attributes {stable_mosaic.version = 11 : i64} {
  func.func @kernel(%arg0: i32, %arg1: i32, %arg2: memref<1x1x16x16xf32, #tpu.memory_space<vmem>>, %arg3: memref<1x16x16xi8, #tpu.memory_space<vmem>>, %arg4: memref<1x1x1x1xf32, #tpu.memory_space<vmem>>) attributes {dimension_semantics = [#tpu.dimension_semantics<parallel>, #tpu.dimension_semantics<parallel>], iteration_bounds = array<i64: 2, 4>, scalar_prefetch = 0 : i64, scratch_operands = 0 : i64, tpu.core_type = #tpu.core_type<tc>, window_params = [{transform_indices = @transform_0, window_bounds = array<i64: 1, 1, 16, 16>}, {transform_indices = @transform_1, window_bounds = array<i64: 1, 16, 16>}, {transform_indices = @transform_2, window_bounds = array<i64: 1, 1, 1, 1>}]} {
    %c0 = arith.constant 0 : index
    %c0_0 = arith.constant 0 : index
    %c0_1 = arith.constant 0 : index
    %c0_2 = arith.constant 0 : index
    %0 = vector.load %arg2[%c0, %c0_0, %c0_1, %c0_2] : memref<1x1x16x16xf32, #tpu.memory_space<vmem>>, vector<1x1x16x16xf32>
    %1 = vector.shape_cast %0 : vector<1x1x16x16xf32> to vector<16x16xf32>
    %cst = arith.constant 5.000000e-01 : f32
    %2 = vector.broadcast %cst : f32 to vector<16x16xf32>
    %3 = arith.cmpf oge, %1, %2 : vector<16x16xf32>
    %4 = arith.extui %3 : vector<16x16xi1> to vector<16x16xi32>
    %5 = arith.sitofp %4 : vector<16x16xi32> to vector<16x16xf32>
    %c0_3 = arith.constant 0 : index
    %c0_4 = arith.constant 0 : index
    %c0_5 = arith.constant 0 : index
    %6 = vector.load %arg3[%c0_3, %c0_4, %c0_5] : memref<1x16x16xi8, #tpu.memory_space<vmem>>, vector<1x16x16xi8>
    %7 = vector.shape_cast %6 : vector<1x16x16xi8> to vector<16x16xi8>
    %8 = arith.extsi %7 : vector<16x16xi8> to vector<16x16xi32>
    %9 = vector.broadcast %arg1 : i32 to vector<16x16xi32>
    %10 = arith.cmpi eq, %8, %9 : vector<16x16xi32>
    %11 = arith.extui %10 : vector<16x16xi1> to vector<16x16xi32>
    %12 = arith.sitofp %11 : vector<16x16xi32> to vector<16x16xf32>
    %13 = arith.addf %5, %12 : vector<16x16xf32>
    %14 = arith.mulf %5, %12 : vector<16x16xf32>
    %cst_6 = arith.constant 2.000000e+00 : f32
    %15 = vector.broadcast %cst_6 : f32 to vector<16x16xf32>
    %16 = arith.mulf %15, %14 : vector<16x16xf32>
    %17 = arith.subf %13, %16 : vector<16x16xf32>
    %18 = vector.shape_cast %17 : vector<16x16xf32> to vector<1x16x16xf32>
    %cst_7 = arith.constant dense<0.000000e+00> : vector<1xf32>
    %19 = vector.multi_reduction <add>, %18, %cst_7 [1, 2] : vector<1x16x16xf32> to vector<1xf32>
    %20 = vector.shape_cast %19 : vector<1xf32> to vector<1x1x1xf32>
    %21 = vector.extract %20[0, 0, 0] : f32 from vector<1x1x1xf32>
    %22 = vector.broadcast %21 : f32 to vector<1x1xf32>
    %23 = vector.extract_strided_slice %5 {offsets = [1, 0], sizes = [15, 16], strides = [1, 1]} : vector<16x16xf32> to vector<15x16xf32>
    %24 = vector.extract_strided_slice %5 {offsets = [0, 0], sizes = [15, 16], strides = [1, 1]} : vector<16x16xf32> to vector<15x16xf32>
    %25 = arith.subf %23, %24 : vector<15x16xf32>
    %26 = arith.mulf %25, %25 : vector<15x16xf32>
    %27 = vector.extract_strided_slice %5 {offsets = [0, 1], sizes = [16, 15], strides = [1, 1]} : vector<16x16xf32> to vector<16x15xf32>
    %28 = vector.extract_strided_slice %5 {offsets = [0, 0], sizes = [16, 15], strides = [1, 1]} : vector<16x16xf32> to vector<16x15xf32>
    %29 = arith.subf %27, %28 : vector<16x15xf32>
    %30 = arith.mulf %29, %29 : vector<16x15xf32>
    %31 = vector.extract_strided_slice %26 {offsets = [1, 0], sizes = [14, 14], strides = [1, 1]} : vector<15x16xf32> to vector<14x14xf32>
    %32 = vector.extract_strided_slice %30 {offsets = [0, 1], sizes = [14, 14], strides = [1, 1]} : vector<16x15xf32> to vector<14x14xf32>
    %33 = arith.addf %31, %32 : vector<14x14xf32>
    %34 = vector.shape_cast %33 : vector<14x14xf32> to vector<1x14x14xf32>
    %cst_8 = arith.constant dense<0.000000e+00> : vector<1xf32>
    %35 = vector.multi_reduction <add>, %34, %cst_8 [1, 2] : vector<1x14x14xf32> to vector<1xf32>
    %36 = vector.shape_cast %35 : vector<1xf32> to vector<1x1x1xf32>
    %37 = vector.extract %36[0, 0, 0] : f32 from vector<1x1x1xf32>
    %38 = vector.broadcast %37 : f32 to vector<1x1xf32>
    %39 = arith.mulf %31, %32 : vector<14x14xf32>
    %40 = vector.shape_cast %39 : vector<14x14xf32> to vector<1x14x14xf32>
    %cst_9 = arith.constant dense<0.000000e+00> : vector<1xf32>
    %41 = vector.multi_reduction <add>, %40, %cst_9 [1, 2] : vector<1x14x14xf32> to vector<1xf32>
    %42 = vector.shape_cast %41 : vector<1xf32> to vector<1x1x1xf32>
    %43 = vector.extract %42[0, 0, 0] : f32 from vector<1x1x1xf32>
    %44 = vector.broadcast %43 : f32 to vector<1x1xf32>
    %cst_10 = arith.constant 0.999899983 : f32
    %45 = vector.broadcast %cst_10 : f32 to vector<1x1xf32>
    %46 = arith.mulf %45, %38 : vector<1x1xf32>
    %cst_11 = arith.constant -0.585686445 : f32
    %47 = vector.broadcast %cst_11 : f32 to vector<1x1xf32>
    %48 = arith.mulf %47, %44 : vector<1x1xf32>
    %49 = arith.addf %46, %48 : vector<1x1xf32>
    %cst_12 = arith.constant 0.00255102036 : f32
    %50 = vector.broadcast %cst_12 : f32 to vector<1x1xf32>
    %51 = arith.mulf %50, %49 : vector<1x1xf32>
    %cst_13 = arith.constant 5.000000e-05 : f32
    %52 = vector.broadcast %cst_13 : f32 to vector<1x1xf32>
    %53 = arith.addf %52, %51 : vector<1x1xf32>
    %cst_14 = arith.constant 0.001953125 : f32
    %54 = vector.broadcast %cst_14 : f32 to vector<1x1xf32>
    %55 = arith.mulf %54, %22 : vector<1x1xf32>
    %56 = arith.addf %53, %55 : vector<1x1xf32>
    %c0_15 = arith.constant 0 : index
    %c0_16 = arith.constant 0 : index
    %c0_17 = arith.constant 0 : index
    %c0_18 = arith.constant 0 : index
    %57 = vector.load %arg4[%c0_15, %c0_16, %c0_17, %c0_18] : memref<1x1x1x1xf32, #tpu.memory_space<vmem>>, vector<1x1x1x1xf32>
    %58 = vector.shape_cast %57 : vector<1x1x1x1xf32> to vector<1x1xf32>
    %59 = vector.shape_cast %56 : vector<1x1xf32> to vector<1x1x1x1xf32>
    tpu.vector_store %arg4[%c0_15, %c0_16, %c0_17, %c0_18], %59 {strides = array<i32>} : memref<1x1x1x1xf32, #tpu.memory_space<vmem>>, vector<1x1x1x1xf32>,
    return
  }
  func.func @transform_0(%arg0: i32, %arg1: i32) -> (i32, i32, i32, i32) {
    %c0_i32 = arith.constant 0 : i32
    %c0_i32_0 = arith.constant 0 : i32
    %c0_i32_1 = arith.constant 0 : i32
    return %arg0, %arg1, %c0_i32, %c0_i32_0 : i32, i32, i32, i32
  }
  func.func @transform_1(%arg0: i32, %arg1: i32) -> (i32, i32, i32) {
    %c0_i32 = arith.constant 0 : i32
    %c0_i32_0 = arith.constant 0 : i32
    %c0_i32_1 = arith.constant 0 : i32
    return %arg0, %c0_i32, %c0_i32_0 : i32, i32, i32
  }
  func.func @transform_2(%arg0: i32, %arg1: i32) -> (i32, i32, i32, i32) {
    %c0_i32 = arith.constant 0 : i32
    %c0_i32_0 = arith.constant 0 : i32
    %c0_i32_1 = arith.constant 0 : i32
    return %arg0, %arg1, %c0_i32, %c0_i32_0 : i32, i32, i32, i32
  }
}

</mosaic_0001>

<llo_original>
// kernel: tpu_custom_call.1
$region0: #{tpu_custom_call.1}
  #allocation0 [shape = 'u32[]', space=smem, size = 0x4, offset = 0x4, fixed_abs, tag = 'smem constant byte address 0x4 - core index']
  #allocation1 [shape = 'u32[72,128]{1,0:T(1,128)}', space=vmem, size = 0x9000, scoped, tag = 'internal scratch']
  %s0 = inlined_call_operand.hbm [shape: f32[2,4,16,16], index: 0, kind: input, shape index: {}]
  %s1 = inlined_call_operand.hbm [shape: s8[2,16,16], index: 1, kind: input, shape index: {}]
  %s2 = inlined_call_operand.vmem [shape: f32[2,4,1,1], index: 2, kind: output, shape index: {}]
  %s3 = sld [smem:[#allocation0]]
  $region49: #{tpu_custom_call.1} parent=0
    _
  %s5 = ssub.s32 1, %s3
  %s6 = scalar_select 0, %s5, %s3
  $region1: #{tpu_custom_call.1} parent=0
    #allocation2 [shape = 'u8[16384]{0}', space=vmem, size = 0x4000, scoped, tag = 'input window, operand 0']
    #allocation3 [shape = 's32[2]{0}', space=sflag, size = 0x8, scoped, tag = 'scoped memory for tpu_custom_call.1']
    #allocation4 [shape = 'u8[4096]{0}', space=vmem, size = 0x1000, scoped, tag = 'input window, operand 1']
    #allocation5 [shape = 's32[2]{0}', space=sflag, size = 0x8, scoped, tag = 'scoped memory for tpu_custom_call.1']
    %7 = vsyncpa [#allocation3], 0
    %s8 = scalar_lea.sflag [#allocation3], 1
    %9 = vsyncpa %s8, 0
    %10 = vsyncpa [#allocation5], 0
    %s11 = scalar_lea.sflag [#allocation5], 1
    %12 = vsyncpa %s11, 0
    loop: start=0, step=1, limit=10
    $region2: #{tpu_custom_call.1} parent=1 // loop_pre_header
      _
    $region3: #{tpu_custom_call.1} parent=1 // loop_header
      %s14 = sphi 0, %s18
      %p15 = scmp.ge.s32.totalorder %s14, 10
      %s21 = sphi 0, %s33
      %s22 = sphi 0, %s29
      %s23 = sphi 0, %s21
      %s24 = sphi 0, %s22
      %s25 = sphi 0, %s23
      %s26 = sphi 0, %s24
      %s38 = sphi 0, %s40
      %s41 = sphi 0, %s38
      %s42 = sphi 0, %s41
      %s58 = sphi 0, %s42
      %s64 = sphi 0, %s66
      %s67 = sphi 0, %s64
      %s68 = sphi 0, %s67
      %s84 = sphi 0, %s68
      %s92 = sphi 0, %s94
      %s95 = sphi 0, %s92
      %s96 = sphi 0, %s95
      %s112 = sphi 0, %s96
    $region4: #{tpu_custom_call.1} parent=1 // loop_header_branch
      %17 = sbr.rel (%p15) target = $region8
    $region5: #{tpu_custom_call.1} parent=1 // loop_body
      %s19 = ssub.s32 %s14, 1
      %s20 = ssub.s32 %s14, 2
      %s27 = sadd.s32 1, %s22
      %p28 = scmp.ge.s32.totalorder %s27, 4
      %s29 = scalar_select %p28, 0, %s27
      %s30 = sadd.s32 1, %s21
      %s31 = scalar_select %p28, %s30, %s21
      %p32 = scmp.ge.s32.totalorder %s31, 2
      %s33 = scalar_select %p32, 0, %s31
      %s34 = ssub.s32 %s21, %s33
      %s35 = ssub.s32 %s22, %s29
      %s36 = sor.u32 %s34, %s35
      %p37 = scmp.eq.s32.totalorder %s36, 0
      %s39 = sadd.s32 %s38, 1
      %s40 = scalar_select %p37, %s38, %s39
      %p43 = pneg %p37
      %p44 = scmp.eq.s32.totalorder %s14, 7
      %p45 = por %p43, %p44
      %p46 = scmp.ne.s32.totalorder %s38, %s41
      %p47 = scmp.eq.s32.totalorder %s14, 0
      %p48 = por %p46, %p47
      %p49 = scmp.ne.s32.totalorder %s38, %s41
      %p50 = scmp.eq.s32.totalorder %s19, 7
      %p51 = por %p49, %p50
      %p52 = scmp.ne.s32.totalorder %s41, %s42
      %p53 = scmp.eq.s32.totalorder %s19, 0
      %p54 = por %p52, %p53
      %p55 = scmp.ne.s32.totalorder %s41, %s42
      %p56 = scmp.eq.s32.totalorder %s20, 7
      %p57 = por %p55, %p56
      %p59 = scmp.ne.s32.totalorder %s42, %s58
      %p60 = scmp.eq.s32.totalorder %s20, 0
      %p61 = por %p59, %p60
      %s62 = ssub.s32 %s21, %s33
      %p63 = scmp.eq.s32.totalorder %s62, 0
      %s65 = sadd.s32 %s64, 1
      %s66 = scalar_select %p63, %s64, %s65
      %p69 = pneg %p63
      %p70 = scmp.eq.s32.totalorder %s14, 7
      %p71 = por %p69, %p70
      %p72 = scmp.ne.s32.totalorder %s64, %s67
      %p73 = scmp.eq.s32.totalorder %s14, 0
      %p74 = por %p72, %p73
      %p75 = scmp.ne.s32.totalorder %s64, %s67
      %p76 = scmp.eq.s32.totalorder %s19, 7
      %p77 = por %p75, %p76
      %p78 = scmp.ne.s32.totalorder %s67, %s68
      %p79 = scmp.eq.s32.totalorder %s19, 0
      %p80 = por %p78, %p79
      %p81 = scmp.ne.s32.totalorder %s67, %s68
      %p82 = scmp.eq.s32.totalorder %s20, 7
      %p83 = por %p81, %p82
      %p85 = scmp.ne.s32.totalorder %s68, %s84
      %p86 = scmp.eq.s32.totalorder %s20, 0
      %p87 = por %p85, %p86
      %s88 = ssub.s32 %s21, %s33
      %s89 = ssub.s32 %s22, %s29
      %s90 = sor.u32 %s88, %s89
      %p91 = scmp.eq.s32.totalorder %s90, 0
      %s93 = sadd.s32 %s92, 1
      %s94 = scalar_select %p91, %s92, %s93
      %p97 = pneg %p91
      %p98 = scmp.eq.s32.totalorder %s14, 7
      %p99 = por %p97, %p98
      %p100 = scmp.ne.s32.totalorder %s92, %s95
      %p101 = scmp.eq.s32.totalorder %s14, 0
      %p102 = por %p100, %p101
      %p103 = scmp.ne.s32.totalorder %s92, %s95
      %p104 = scmp.eq.s32.totalorder %s19, 7
      %p105 = por %p103, %p104
      %p106 = scmp.ne.s32.totalorder %s95, %s96
      %p107 = scmp.eq.s32.totalorder %s19, 0
      %p108 = por %p106, %p107
      %p109 = scmp.ne.s32.totalorder %s95, %s96
      %p110 = scmp.eq.s32.totalorder %s20, 7
      %p111 = por %p109, %p110
      %p113 = scmp.ne.s32.totalorder %s96, %s112
      %p114 = scmp.eq.s32.totalorder %s20, 0
      %p115 = por %p113, %p114
      %p116 = scmp.le.s32.totalorder 1, %s14
      %p117 = scmp.lt.s32.totalorder %s14, 9
      %p118 = pnand %p116, %p117
      %p119 = pneg %p118
      // Predicated region
      $region9: #{tpu_custom_call.1} parent=5 // pred_check
        _
      $region10: #{tpu_custom_call.1} parent=5 // pred_check_branch
        %121 = sbr.rel (%p118) target = $region12
      $region11: #{tpu_custom_call.1} parent=5 // pred_region
        %s122 = ssub.s32 %s14, 1
      $region12: #{tpu_custom_call.1} parent=5 // pred_fallthru
        _
      %p123 = scmp.lt.s32.totalorder %s14, 8
      // Predicated region
      $region13: #{tpu_custom_call.1} parent=5 // pred_check
        %p124 = pneg %p123
      $region14: #{tpu_custom_call.1} parent=5 // pred_check_branch
        %126 = sbr.rel (%p124) target = $region16
      $region15: #{tpu_custom_call.1} parent=5 // pred_region
        // Predicated region
        $region17: #{tpu_custom_call.1} parent=15 // pred_check
          %p127 = pneg %p48
        $region18: #{tpu_custom_call.1} parent=15 // pred_check_branch
          %129 = sbr.rel (%p127) target = $region20
        $region19: #{tpu_custom_call.1} parent=15 // pred_region
          %s130 = sand.u32 %s38, 1
          %s131 = scalar_lea.sflag [#allocation3], %s130
          %s132 = sand.u32 %s38, 1
          %s133 = smul.addr %s132, 16
          %s134 = scalar_lea.vmem [#allocation2], %s133
          %136 = vsyncadd %s131, 0
          %s137 = smul.addr %s22, 2
          %s138 = smul.addr %s21, 8
          %s139 = sadd.s32 %s137, %s138
          %s140 = smul.addr %s139, 8
          %s141 = scalar_lea.hbm %s0, %s140
          %s142 = sshll.u32 %s141, 4
          %s143 = int_to_ptr.hbm [resolvable:$true] %s142
          %s144 = sshll.u32 %s134, 4
          %s145 = int_to_ptr.vmem [resolvable:$true] %s144
          %150 = dma.hbm_to_vmem [thread:$0]  %s143, 256, %s145, %s131, 128, 128, 8
        $region20: #{tpu_custom_call.1} parent=15 // pred_fallthru
          _
        // Predicated region
        $region21: #{tpu_custom_call.1} parent=15 // pred_check
          %p151 = pneg %p74
        $region22: #{tpu_custom_call.1} parent=15 // pred_check_branch
          %153 = sbr.rel (%p151) target = $region24
        $region23: #{tpu_custom_call.1} parent=15 // pred_region
          %s154 = sand.u32 %s64, 1
          %s155 = scalar_lea.sflag [#allocation5], %s154
          %s156 = sand.u32 %s64, 1
          %s157 = smul.addr %s156, 4
          %s158 = scalar_lea.vmem [#allocation4], %s157
          %160 = vsyncadd %s155, 0
          %s161 = smul.addr %s21, 2
          %s162 = smul.addr %s161, 2
          %s163 = scalar_lea.hbm %s1, %s162
          %s164 = sshll.u32 %s163, 4
          %s165 = int_to_ptr.hbm [resolvable:$true] %s164
          %s166 = sshll.u32 %s158, 4
          %s167 = int_to_ptr.vmem [resolvable:$true] %s166
          %172 = dma.hbm_to_vmem [thread:$0]  %s165, 64, %s167, %s155, 32, 32, 2
        $region24: #{tpu_custom_call.1} parent=15 // pred_fallthru
          _
      $region16: #{tpu_custom_call.1} parent=5 // pred_fallthru
        _
      %p173 = scmp.le.s32.totalorder 1, %s14
      %p174 = scmp.lt.s32.totalorder %s14, 9
      %p175 = pnand %p173, %p174
      %p176 = pneg %p175
      // Predicated region
      $region25: #{tpu_custom_call.1} parent=5 // pred_check
        _
      $region26: #{tpu_custom_call.1} parent=5 // pred_check_branch
        %178 = sbr.rel (%p175) target = $region28
      $region27: #{tpu_custom_call.1} parent=5 // pred_region
        %s179 = ssub.s32 %s14, 1
        %s180 = sand.u32 %s41, 1
        %s181 = scalar_lea.sflag [#allocation3], %s180
        %s182 = sand.u32 %s41, 1
        %s183 = smul.addr %s182, 16
        %s184 = scalar_lea.vmem [#allocation2], %s183
        // Predicated region
        $region29: #{tpu_custom_call.1} parent=27 // pred_check
          %p185 = pneg %p54
        $region30: #{tpu_custom_call.1} parent=27 // pred_check_branch
          %187 = sbr.rel (%p185) target = $region32
        $region31: #{tpu_custom_call.1} parent=27 // pred_region
          %189 = dma.done %s181, 256
        $region32: #{tpu_custom_call.1} parent=27 // pred_fallthru
          _
        %s190 = sand.u32 %s67, 1
        %s191 = scalar_lea.sflag [#allocation5], %s190
        %s192 = sand.u32 %s67, 1
        %s193 = smul.addr %s192, 4
        %s194 = scalar_lea.vmem [#allocation4], %s193
        // Predicated region
        $region33: #{tpu_custom_call.1} parent=27 // pred_check
          %p195 = pneg %p80
        $region34: #{tpu_custom_call.1} parent=27 // pred_check_branch
          %197 = sbr.rel (%p195) target = $region36
        $region35: #{tpu_custom_call.1} parent=27 // pred_region
          %199 = dma.done %s191, 64
        $region36: #{tpu_custom_call.1} parent=27 // pred_fallthru
          _
        %s200 = sand.u32 %s41, 1
        %s201 = scalar_lea.sflag [#allocation3], %s200
        %s202 = sand.u32 %s41, 1
        %s203 = smul.addr %s202, 16
        %s204 = scalar_lea.vmem [#allocation2], %s203
        %p205 = pneg %p54
        %p206 = pneg %p51
        %s207 = sand.u32 %s67, 1
        %s208 = scalar_lea.sflag [#allocation5], %s207
        %s209 = sand.u32 %s67, 1
        %s210 = smul.addr %s209, 4
        %s211 = scalar_lea.vmem [#allocation4], %s210
        %p212 = pneg %p80
        %p213 = pneg %p77
        %p214 = pneg %p108
        %p215 = pneg %p105
        %p216 = scmp.lt.s32.totalorder %s23, 1
        %s217 = scalar_select %p216, %s23, 1
        %p218 = scmp.lt.s32.totalorder %s24, 3
        %s219 = scalar_select %p218, %s24, 3
        %s220 = smul.addr %s217, 4
        %s221 = sadd.s32 %s219, %s220
        %s222 = scalar_lea.vmem %s2, %s221
        %p223 = scmp.lt.s32.totalorder %s23, 1
        %s224 = scalar_select %p223, %s23, 1
        %p225 = scmp.lt.s32.totalorder %s24, 3
        %s226 = scalar_select %p225, %s24, 3
        %s227 = smul.addr %s224, 4
        %s228 = sadd.s32 %s226, %s227
        %s229 = scalar_lea.vmem %s2, %s228
        %v230 = vld [vmem:[%s184] sm:$0xff]
        %v231 = vld [vmem:[%s184 + $0x8] sm:$0xff]
        %vm232 = vcmp.ge.f32.partialorder %v230, 0.5
        %vm233 = vcmp.ge.f32.partialorder %v231, 0.5
        %v234 = vsel %vm232, 1, 0
        %v235 = vsel %vm233, 1, 0
        %v236 = vcvt.s32.f32 %v234
        %v237 = vcvt.s32.f32 %v235
        %v238 = vld [vmem:[%s194] sm:$0x3]
        %v239 = vld [vmem:[%s194 + $0x2] sm:$0x3]
        %v240 = vunpack.c.0.s8 %v238
        %v241 = vunpack.c.0.s8 %v239
        %v242 = vstv %s24
        %vm243 = vcmp.eq.s32.totalorder %v240, %v242
        %vm244 = vcmp.eq.s32.totalorder %v241, %v242
        %v245 = vsel %vm243, 1, 0
        %v246 = vsel %vm244, 1, 0
        %v247 = vcvt.s32.f32 %v245
        %v248 = vcvt.s32.f32 %v246
        %v249 = vadd.f32 %v236, %v247
        %v250 = vadd.f32 %v237, %v248
        %v251 = vmul.f32 %v236, %v247
        %v252 = vmul.f32 %v237, %v248
        %v253 = vmul.f32 %v251, 2.0
        %v254 = vmul.f32 %v252, 2.0
        %v255 = vsub.f32 %v249, %v253
        %v256 = vsub.f32 %v250, %v254
        %vm257 = vcmask 130048
        %v258 = vsel %vm257, %v255, 0.0
        %v259 = vsel %vm257, %v256, 0.0
        %v260 = vadd.f32 %v258, %v259
        %261 = vadd.xlane.f32.xlu0 %v260
        %v262 = vpop.xlane.xlu0 %261
        %v263 = vrot.slane %v262, 4
        %v264 = vadd.f32 %v262, %v263
        %v265 = vrot.slane %v264, 2
        %v266 = vadd.f32 %v264, %v265
        %v267 = vrot.slane %v266, 1
        %v268 = vadd.f32 %v266, %v267
        %s269 = vtos %v268
        %v270 = vstv %s269
        %vm273 = vcmask 1040384
        %v274 = vrot.slane %v236, 7
        %v275 = vrot.slane %v237, 7
        %v276 = vsel %vm273, %v274, %v275
        %v279 = vsub.f32 %v236, %v274
        %v280 = vsub.f32 %v237, %v276
        %v281 = vmul.f32 %v279, %v279
        %v282 = vmul.f32 %v280, %v280
        %283 = vrot.lane.b32.xlu0 %v236, 1
        %v284 = vpop.permute.xlu0 %283
        %285 = vrot.lane.b32.xlu0 %v237, 1
        %v286 = vpop.permute.xlu0 %285
        %v289 = vsub.f32 %v236, %v284
        %v290 = vsub.f32 %v237, %v286
        %v291 = vmul.f32 %v289, %v289
        %v292 = vmul.f32 %v290, %v290
        %vm295 = vcmask 1041408
        %v296 = vrot.slane %v291, 6
        %v297 = vrot.slane %v292, 6
        %v298 = vsel %vm295, %v296, %v297
        %299 = vrot.lane.b32.xlu0 %v296, 126
        %v300 = vpop.permute.xlu0 %299
        %301 = vrot.lane.b32.xlu0 %v298, 126
        %v302 = vpop.permute.xlu0 %301
        %v305 = vadd.f32 %v281, %v300
        %v306 = vadd.f32 %v282, %v302
        %vm309 = vcmask 1045504
        %v310 = vrot.slane %v305, 2
        %v311 = vrot.slane %v306, 2
        %v312 = vsel %vm309, %v310, %v311
        %vm315 = vcmask 113664
        %v316 = vsel %vm315, %v312, 0.0
        %vm317 = vcmask 111616
        %v318 = vsel %vm317, %v311, 0.0
        %v319 = vadd.f32 %v316, %v318
        %320 = vadd.xlane.f32.xlu0 %v319
        %v321 = vpop.xlane.xlu0 %320
        %v322 = vrot.slane %v321, 4
        %v323 = vadd.f32 %v321, %v322
        %v324 = vrot.slane %v323, 2
        %v325 = vadd.f32 %v323, %v324
        %v326 = vrot.slane %v325, 1
        %v327 = vadd.f32 %v325, %v326
        %s328 = vtos %v327
        %v329 = vstv %s328
        %v330 = vmul.f32 %v281, %v300
        %v331 = vmul.f32 %v282, %v302
        %v334 = vrot.slane %v330, 2
        %v335 = vrot.slane %v331, 2
        %v336 = vsel %vm309, %v334, %v335
        %v339 = vsel %vm315, %v336, 0.0
        %v340 = vsel %vm317, %v335, 0.0
        %v341 = vadd.f32 %v339, %v340
        %342 = vadd.xlane.f32.xlu0 %v341
        %v343 = vpop.xlane.xlu0 %342
        %v344 = vrot.slane %v343, 4
        %v345 = vadd.f32 %v343, %v344
        %v346 = vrot.slane %v345, 2
        %v347 = vadd.f32 %v345, %v346
        %v348 = vrot.slane %v347, 1
        %v349 = vadd.f32 %v347, %v348
        %s350 = vtos %v349
        %v351 = vstv %s350
        %v352 = vmul.f32 %v329, 0.9999
        %v353 = vmul.f32 %v351, -0.58568645
        %v354 = vadd.f32 %v352, %v353
        %v355 = vmul.f32 %v354, 0.0025510204
        %v356 = vadd.f32 %v355, 5e-05
        %v357 = vmul.f32 %v270, 0.001953125
        %v358 = vadd.f32 %v356, %v357
        %vm359 = vcmask 0
        %360 = vst.msk [vmem:[%s229] sm:$0x1] %vm359, %v358
        %p361 = scmp.lt.s32.totalorder %s23, 1
        %s362 = scalar_select %p361, %s23, 1
        %p363 = scmp.lt.s32.totalorder %s24, 3
        %s364 = scalar_select %p363, %s24, 3
        %s365 = smul.addr %s362, 4
        %s366 = sadd.s32 %s364, %s365
        %s367 = scalar_lea.vmem %s2, %s366
        // Predicated region
        $region37: #{tpu_custom_call.1} parent=27 // pred_check
          %p368 = pneg %p105
        $region38: #{tpu_custom_call.1} parent=27 // pred_check_branch
          %370 = sbr.rel (%p368) target = $region40
        $region39: #{tpu_custom_call.1} parent=27 // pred_region
          _
        $region40: #{tpu_custom_call.1} parent=27 // pred_fallthru
          _
      $region28: #{tpu_custom_call.1} parent=5 // pred_fallthru
        _
      %p371 = scmp.le.s32.totalorder 2, %s14
      // Predicated region
      $region41: #{tpu_custom_call.1} parent=5 // pred_check
        %p372 = pneg %p371
      $region42: #{tpu_custom_call.1} parent=5 // pred_check_branch
        %374 = sbr.rel (%p372) target = $region44
      $region43: #{tpu_custom_call.1} parent=5 // pred_region
        %s375 = ssub.s32 %s14, 2
        // Predicated region
        $region45: #{tpu_custom_call.1} parent=43 // pred_check
          %p376 = pneg %p111
        $region46: #{tpu_custom_call.1} parent=43 // pred_check_branch
          %378 = sbr.rel (%p376) target = $region48
        $region47: #{tpu_custom_call.1} parent=43 // pred_region
          %p379 = scmp.lt.s32.totalorder %s25, 1
          %s380 = scalar_select %p379, %s25, 1
          %p381 = scmp.lt.s32.totalorder %s26, 3
          %s382 = scalar_select %p381, %s26, 3
          %s383 = smul.addr %s380, 4
          %s384 = sadd.s32 %s382, %s383
          %s385 = scalar_lea.vmem %s2, %s384
        $region48: #{tpu_custom_call.1} parent=43 // pred_fallthru
          _
      $region44: #{tpu_custom_call.1} parent=5 // pred_fallthru
        _
    $region6: #{tpu_custom_call.1} parent=1 // loop_footer
      %s18 = sadd.s32 1, %s14
    $region7: #{tpu_custom_call.1} parent=1 // loop_footer_branch
      %13 = sbr.rel target = $region3
    $region8: #{tpu_custom_call.1} parent=1 // loop_exit
      _
    %386 = vsyncpa [#allocation3], 1
    %s387 = scalar_lea.sflag [#allocation3], 1
    %388 = vsyncpa %s387, 1
    %389 = vsyncpa [#allocation5], 1
    %s390 = scalar_lea.sflag [#allocation5], 1
    %391 = vsyncpa %s390, 1

</llo_original>
